<compile_context>
chip_gen: v7x
topology: tpu7x:2x2x1
jax: 0.10.0
libtpu: 0.0.40
codegen_flags: <defaults>
</compile_context>

<pallas_src>
import functools

import jax
import jax.numpy as jnp
from jax import lax
from jax.experimental import pallas as pl
from jax.experimental.pallas import tpu as pltpu

EPS = 1e-5  # torch.nn.LayerNorm default


def _conv_layernorm_kernel(x_ref, w_ref, b_ref, o_ref, *, n_true):
    # x_ref: (TB, Np), w_ref/b_ref: (1, Np) f32, o_ref: (TB, Np)
    x = x_ref[...].astype(jnp.float32)
    inv_n = 1.0 / n_true
    s1 = jnp.sum(x, axis=-1, keepdims=True)
    s2 = jnp.sum(x * x, axis=-1, keepdims=True)
    mean = s1 * inv_n
    var = jnp.maximum(s2 * inv_n - mean * mean, 0.0)  # biased var, like torch LayerNorm
    inv = lax.rsqrt(var + EPS)
    y = (x - mean) * inv * w_ref[...] + b_ref[...]
    o_ref[...] = y.astype(o_ref.dtype)


def _choose_tb(B, Np, itemsize):
    """Batch tile: multiple of 8 (sublane), ~2 MiB per x tile so double-buffered
    in+out tiles stay well under scoped-VMEM defaults on all TPU generations."""
    if B <= 8:
        return B  # full-dim block satisfies the (8,128) rule
    target_bytes = 2 * 1024 * 1024
    tb = (target_bytes // (Np * itemsize)) // 8 * 8
    return int(max(8, min(B, tb)))


def conv_layer_norm(x_nchw, weight, bias):
    """x_nchw: (B, C, H, W); weight, bias: (C*H*W,). Returns (B, C, H, W)."""
    B = x_nchw.shape[0]
    N = x_nchw.size // B
    x2d = x_nchw.reshape(B, N)

    # Pad lane dim to a multiple of 128 for unmasked, lane-dense stores.
    Np = pl.cdiv(N, 128) * 128
    if Np != N:
        x2d = jnp.pad(x2d, ((0, 0), (0, Np - N)))  # zeros -> sums unchanged
        weight = jnp.pad(weight, (0, Np - N))
        bias = jnp.pad(bias, (0, Np - N))
    w2d = weight.reshape(1, Np).astype(jnp.float32)
    b2d = bias.reshape(1, Np).astype(jnp.float32)

    TB = _choose_tb(B, Np, x2d.dtype.itemsize)
    grid = (pl.cdiv(B, TB),)

    kernel = functools.partial(_conv_layernorm_kernel, n_true=float(N))
    out2d = pl.pallas_call(
        kernel,
        out_shape=jax.ShapeDtypeStruct((B, Np), x2d.dtype),
        grid_spec=pl.GridSpec(
            grid=grid,
            in_specs=[
                pl.BlockSpec((TB, Np), lambda i: (i, 0)),   # x: tiled over batch
                pl.BlockSpec((1, Np), lambda i: (0, 0)),    # weight: VMEM-resident
                pl.BlockSpec((1, Np), lambda i: (0, 0)),    # bias:   VMEM-resident
            ],
            out_specs=pl.BlockSpec((TB, Np), lambda i: (i, 0)),
        ),
        compiler_params=pltpu.CompilerParams(
            dimension_semantics=("parallel",),
            vmem_limit_bytes=32 * 1024 * 1024,
        ),
    )(x2d, w2d, b2d)

    if Np != N:
        out2d = out2d[:, :N]
    return out2d.reshape(x_nchw.shape)


if __name__ == "__main__":
    # elems = C*H*W for a ConvLayerNorm(nn.LayerNorm, elems) wrapping NCHW activations.
    B, C, H, W = 2, 4, 16, 16
    N = C * H * W

    key = jax.random.PRNGKey(0)
    kx, kw, kb = jax.random.split(key, 3)
    x = jax.random.normal(kx, (B, C, H, W), dtype=jnp.float32)
    # torch init is weight=1, bias=0; perturb deterministically so the affine path is non-trivial.
    weight = 1.0 + 0.1 * jax.random.normal(kw, (N,), dtype=jnp.float32)
    bias = 0.1 * jax.random.normal(kb, (N,), dtype=jnp.float32)

    out = conv_layer_norm(x, weight, bias)
    out = jax.block_until_ready(out)

    # Pure-JAX reference check (two-pass, torch LayerNorm semantics).
    x2d = x.reshape(B, N)
    mean = jnp.mean(x2d, axis=-1, keepdims=True)
    var = jnp.mean((x2d - mean) ** 2, axis=-1, keepdims=True)
    ref = ((x2d - mean) / jnp.sqrt(var + EPS) * weight + bias).reshape(B, C, H, W)
    assert jnp.allclose(out, ref, atol=1e-4, rtol=1e-4), "mismatch vs reference"

    print("KERNEL_OK")
</pallas_src>

<mosaic_0001>
module attributes {stable_mosaic.version = 11 : i64} {
  func.func @_conv_layernorm_kernel(%arg0: i32, %arg1: memref<2x1024xf32, #tpu.memory_space<vmem>>, %arg2: memref<1x1024xf32, #tpu.memory_space<vmem>>, %arg3: memref<1x1024xf32, #tpu.memory_space<vmem>>, %arg4: memref<2x1024xf32, #tpu.memory_space<vmem>>) attributes {dimension_semantics = [#tpu.dimension_semantics<parallel>], iteration_bounds = array<i64: 1>, scalar_prefetch = 0 : i64, scratch_operands = 0 : i64, tpu.core_type = #tpu.core_type<tc>, window_params = [{transform_indices = @transform_0, window_bounds = array<i64: 2, 1024>}, {pipeline_mode = #tpu.pipeline_mode<synchronous>, transform_indices = @transform_1, window_bounds = array<i64: 1, 1024>}, {pipeline_mode = #tpu.pipeline_mode<synchronous>, transform_indices = @transform_2, window_bounds = array<i64: 1, 1024>}, {transform_indices = @transform_3, window_bounds = array<i64: 2, 1024>}]} {
    %c0 = arith.constant 0 : index
    %c0_0 = arith.constant 0 : index
    %0 = vector.load %arg1[%c0, %c0_0] : memref<2x1024xf32, #tpu.memory_space<vmem>>, vector<2x1024xf32>
    %cst = arith.constant dense<0.000000e+00> : vector<2xf32>
    %1 = vector.multi_reduction <add>, %0, %cst [1] : vector<2x1024xf32> to vector<2xf32>
    %2 = vector.shape_cast %1 : vector<2xf32> to vector<2x1xf32>
    %3 = arith.mulf %0, %0 : vector<2x1024xf32>
    %cst_1 = arith.constant dense<0.000000e+00> : vector<2xf32>
    %4 = vector.multi_reduction <add>, %3, %cst_1 [1] : vector<2x1024xf32> to vector<2xf32>
    %5 = vector.shape_cast %4 : vector<2xf32> to vector<2x1xf32>
    %cst_2 = arith.constant 9.765625E-4 : f32
    %6 = vector.broadcast %cst_2 : f32 to vector<2x1xf32>
    %7 = arith.mulf %2, %6 : vector<2x1xf32>
    %cst_3 = arith.constant 9.765625E-4 : f32
    %8 = vector.broadcast %cst_3 : f32 to vector<2x1xf32>
    %9 = arith.mulf %5, %8 : vector<2x1xf32>
    %10 = arith.mulf %7, %7 : vector<2x1xf32>
    %11 = arith.subf %9, %10 : vector<2x1xf32>
    %cst_4 = arith.constant 0.000000e+00 : f32
    %12 = vector.broadcast %cst_4 : f32 to vector<2x1xf32>
    %13 = arith.maximumf %11, %12 : vector<2x1xf32>
    %cst_5 = arith.constant 9.99999974E-6 : f32
    %14 = vector.broadcast %cst_5 : f32 to vector<2x1xf32>
    %15 = arith.addf %13, %14 : vector<2x1xf32>
    %16 = math.rsqrt %15 : vector<2x1xf32>
    %17 = vector.broadcast %7 : vector<2x1xf32> to vector<2x1024xf32>
    %18 = arith.subf %0, %17 : vector<2x1024xf32>
    %19 = vector.broadcast %16 : vector<2x1xf32> to vector<2x1024xf32>
    %20 = arith.mulf %18, %19 : vector<2x1024xf32>
    %c0_6 = arith.constant 0 : index
    %c0_7 = arith.constant 0 : index
    %21 = vector.load %arg2[%c0_6, %c0_7] : memref<1x1024xf32, #tpu.memory_space<vmem>>, vector<1x1024xf32>
    %22 = vector.broadcast %21 : vector<1x1024xf32> to vector<2x1024xf32>
    %23 = arith.mulf %20, %22 : vector<2x1024xf32>
    %c0_8 = arith.constant 0 : index
    %c0_9 = arith.constant 0 : index
    %24 = vector.load %arg3[%c0_8, %c0_9] : memref<1x1024xf32, #tpu.memory_space<vmem>>, vector<1x1024xf32>
    %25 = vector.broadcast %24 : vector<1x1024xf32> to vector<2x1024xf32>
    %26 = arith.addf %23, %25 : vector<2x1024xf32>
    %c0_10 = arith.constant 0 : index
    %c0_11 = arith.constant 0 : index
    %27 = vector.load %arg4[%c0_10, %c0_11] : memref<2x1024xf32, #tpu.memory_space<vmem>>, vector<2x1024xf32>
    tpu.vector_store %arg4[%c0_10, %c0_11], %26 {strides = array<i32>} : memref<2x1024xf32, #tpu.memory_space<vmem>>, vector<2x1024xf32>,
    return
  }
  func.func @transform_0(%arg0: i32) -> (i32, i32) {
    %c0_i32 = arith.constant 0 : i32
    %c0_i32_0 = arith.constant 0 : i32
    return %arg0, %c0_i32 : i32, i32
  }
  func.func @transform_1(%arg0: i32) -> (i32, i32) {
    %c0_i32 = arith.constant 0 : i32
    %c0_i32_0 = arith.constant 0 : i32
    %c0_i32_1 = arith.constant 0 : i32
    return %c0_i32, %c0_i32_0 : i32, i32
  }
  func.func @transform_2(%arg0: i32) -> (i32, i32) {
    %c0_i32 = arith.constant 0 : i32
    %c0_i32_0 = arith.constant 0 : i32
    %c0_i32_1 = arith.constant 0 : i32
    return %c0_i32, %c0_i32_0 : i32, i32
  }
  func.func @transform_3(%arg0: i32) -> (i32, i32) {
    %c0_i32 = arith.constant 0 : i32
    %c0_i32_0 = arith.constant 0 : i32
    return %arg0, %c0_i32 : i32, i32
  }
}

</mosaic_0001>

<llo_original>
// kernel: tpu_custom_call.1
$region0: #{tpu_custom_call.1}
  #allocation0 [shape = 'u32[]', space=smem, size = 0x4, offset = 0x4, fixed_abs, tag = 'smem constant byte address 0x4 - core index']
  #allocation1 [shape = 'u32[144,128]{1,0:T(1,128)}', space=vmem, size = 0x12000, scoped, tag = 'internal scratch']
  %s0 = inlined_call_operand.hbm [shape: f32[2,1024], index: 0, kind: input, shape index: {}]
  %s1 = inlined_call_operand.hbm [shape: f32[1,1024], index: 1, kind: input, shape index: {}]
  %s2 = inlined_call_operand.hbm [shape: f32[1,1024], index: 2, kind: input, shape index: {}]
  %s3 = inlined_call_operand.hbm [shape: f32[2,1024], index: 3, kind: output, shape index: {}]
  %s4 = sld [smem:[#allocation0]]
  $region34: #{tpu_custom_call.1} parent=0
    _
  %s6 = ssub.s32 1, %s4
  %s7 = scalar_select 0, %s6, %s4
  $region1: #{tpu_custom_call.1} parent=0
    #allocation2 [shape = 'u8[8192]{0}', space=vmem, size = 0x2000, scoped, tag = 'input window, operand 0, single buffered']
    #allocation3 [shape = 's32[1]{0}', space=sflag, size = 0x4, scoped, tag = 'scoped memory for tpu_custom_call.1']
    #allocation4 [shape = 's32[1]{0}', space=sflag, size = 0x4, scoped, tag = 'scoped memory for tpu_custom_call.1']
    #allocation5 [shape = 'u8[4096]{0}', space=vmem, size = 0x1000, scoped, tag = 'input window, operand 1, single buffered']
    #allocation6 [shape = 's32[1]{0}', space=sflag, size = 0x4, scoped, tag = 'scoped memory for tpu_custom_call.1']
    #allocation7 [shape = 'u8[4096]{0}', space=vmem, size = 0x1000, scoped, tag = 'input window, operand 2, single buffered']
    #allocation8 [shape = 'u8[8192]{0}', space=vmem, size = 0x2000, scoped, tag = 'output window, operand 0, single buffered']
    %8 = vsyncpa [#allocation3], 0
    %9 = vsyncpa [#allocation6], 0
    %10 = vsyncpa [#allocation4], 0
    // Predicated region
    $region2: #{tpu_custom_call.1} parent=1 // pred_check
      _
    $region3: #{tpu_custom_call.1} parent=1 // pred_check_branch
      %12 = sbr.rel (0) target = $region5
    $region4: #{tpu_custom_call.1} parent=1 // pred_region
      %s14 = ssub.s32 256, 256
      %15 = vsyncadd [#allocation3], %s14
      %s17 = sshll.u32 [#allocation2], 4
      %s18 = int_to_ptr.vmem [resolvable:$true] %s17
      %20 = dma.hbm_to_vmem [thread:$0]  %s0, 256, %s18, [#allocation3]
    $region5: #{tpu_custom_call.1} parent=1 // pred_fallthru
      _
    // Predicated region
    $region6: #{tpu_custom_call.1} parent=1 // pred_check
      _
    $region7: #{tpu_custom_call.1} parent=1 // pred_check_branch
      %22 = sbr.rel (0) target = $region9
    $region8: #{tpu_custom_call.1} parent=1 // pred_region
      %s24 = ssub.s32 128, 128
      %25 = vsyncadd [#allocation6], %s24
      %s27 = sshll.u32 [#allocation5], 4
      %s28 = int_to_ptr.vmem [resolvable:$true] %s27
      %30 = dma.hbm_to_vmem [thread:$0]  %s1, 128, %s28, [#allocation6]
    $region9: #{tpu_custom_call.1} parent=1 // pred_fallthru
      _
    // Predicated region
    $region10: #{tpu_custom_call.1} parent=1 // pred_check
      _
    $region11: #{tpu_custom_call.1} parent=1 // pred_check_branch
      %32 = sbr.rel (0) target = $region13
    $region12: #{tpu_custom_call.1} parent=1 // pred_region
      %s34 = ssub.s32 128, 128
      %35 = vsyncadd [#allocation6], %s34
      %s37 = sshll.u32 [#allocation7], 4
      %s38 = int_to_ptr.vmem [resolvable:$true] %s37
      %40 = dma.hbm_to_vmem [thread:$0]  %s2, 128, %s38, [#allocation6]
    $region13: #{tpu_custom_call.1} parent=1 // pred_fallthru
      _
    // Predicated region
    $region14: #{tpu_custom_call.1} parent=1 // pred_check
      _
    $region15: #{tpu_custom_call.1} parent=1 // pred_check_branch
      %42 = sbr.rel (0) target = $region17
    $region16: #{tpu_custom_call.1} parent=1 // pred_region
      %43 = dma.done [#allocation3], 256
    $region17: #{tpu_custom_call.1} parent=1 // pred_fallthru
      _
    // Predicated region
    $region18: #{tpu_custom_call.1} parent=1 // pred_check
      _
    $region19: #{tpu_custom_call.1} parent=1 // pred_check_branch
      %45 = sbr.rel (0) target = $region21
    $region20: #{tpu_custom_call.1} parent=1 // pred_region
      %46 = dma.done [#allocation6], 128
    $region21: #{tpu_custom_call.1} parent=1 // pred_fallthru
      _
    // Predicated region
    $region22: #{tpu_custom_call.1} parent=1 // pred_check
      _
    $region23: #{tpu_custom_call.1} parent=1 // pred_check_branch
      %48 = sbr.rel (0) target = $region25
    $region24: #{tpu_custom_call.1} parent=1 // pred_region
      %49 = dma.done [#allocation6], 128
    $region25: #{tpu_custom_call.1} parent=1 // pred_fallthru
      _
    %v50 = vld [vmem:[#allocation2] sm:$0xff]
    %v51 = vld [vmem:[#allocation2 + $0x8] sm:$0xff]
    %v54 = vcombine.high %v50, %v50
    %v56 = vunpack.c.l.s4 1983009808
    %v57 = vunpack.c.0.s8 %v56
    %v58 = vlaneseq
    %v59 = vshrl.u32 %v58, 7
    %v60 = vsub.s32 %v57, %v59
    %v61 = vrot.slane %v50, %v60
    %v63 = vunpack.c.l.s4 1983009808
    %v64 = vunpack.c.0.s8 %v63
    %v65 = vlaneseq
    %v66 = vshrl.u32 %v65, 7
    %v67 = vsub.s32 %v64, %v66
    %v68 = vrot.slane %v54, %v67
    %v69 = vcombine.high %v61, %v61
    %v70 = vcombine.high %v68, %v68
    %v71 = vcombine.high %v51, %v51
    %v73 = vunpack.c.l.s4 1983009808
    %v74 = vunpack.c.0.s8 %v73
    %v75 = vlaneseq
    %v76 = vshrl.u32 %v75, 7
    %v77 = vsub.s32 %v74, %v76
    %v78 = vrot.slane %v51, %v77
    %v80 = vunpack.c.l.s4 1983009808
    %v81 = vunpack.c.0.s8 %v80
    %v82 = vlaneseq
    %v83 = vshrl.u32 %v82, 7
    %v84 = vsub.s32 %v81, %v83
    %v85 = vrot.slane %v71, %v84
    %v86 = vcombine.high %v78, %v78
    %v87 = vcombine.high %v85, %v85
    %vm96 = vcmask 1041408
    %v97 = vsel %vm96, %v61, 0.0
    %v98 = vsel %vm96, %v69, 0.0
    %v99 = vadd.f32 %v97, %v98
    %v100 = vsel %vm96, %v68, 0.0
    %v101 = vadd.f32 %v99, %v100
    %v102 = vsel %vm96, %v70, 0.0
    %v103 = vadd.f32 %v101, %v102
    %v104 = vsel %vm96, %v78, 0.0
    %v105 = vadd.f32 %v103, %v104
    %v106 = vsel %vm96, %v86, 0.0
    %v107 = vadd.f32 %v105, %v106
    %v108 = vsel %vm96, %v85, 0.0
    %v109 = vadd.f32 %v107, %v108
    %v110 = vsel %vm96, %v87, 0.0
    %v111 = vadd.f32 %v109, %v110
    %112 = vadd.xlane.f32.xlu0 %v111
    %v113 = vpop.xlane.xlu0 %112
    %v114 = vmul.f32 %v50, %v50
    %v115 = vmul.f32 %v51, %v51
    %v118 = vcombine.high %v114, %v114
    %v120 = vunpack.c.l.s4 1983009808
    %v121 = vunpack.c.0.s8 %v120
    %v122 = vlaneseq
    %v123 = vshrl.u32 %v122, 7
    %v124 = vsub.s32 %v121, %v123
    %v125 = vrot.slane %v114, %v124
    %v127 = vunpack.c.l.s4 1983009808
    %v128 = vunpack.c.0.s8 %v127
    %v129 = vlaneseq
    %v130 = vshrl.u32 %v129, 7
    %v131 = vsub.s32 %v128, %v130
    %v132 = vrot.slane %v118, %v131
    %v133 = vcombine.high %v125, %v125
    %v134 = vcombine.high %v132, %v132
    %v135 = vcombine.high %v115, %v115
    %v137 = vunpack.c.l.s4 1983009808
    %v138 = vunpack.c.0.s8 %v137
    %v139 = vlaneseq
    %v140 = vshrl.u32 %v139, 7
    %v141 = vsub.s32 %v138, %v140
    %v142 = vrot.slane %v115, %v141
    %v144 = vunpack.c.l.s4 1983009808
    %v145 = vunpack.c.0.s8 %v144
    %v146 = vlaneseq
    %v147 = vshrl.u32 %v146, 7
    %v148 = vsub.s32 %v145, %v147
    %v149 = vrot.slane %v135, %v148
    %v150 = vcombine.high %v142, %v142
    %v151 = vcombine.high %v149, %v149
    %v160 = vsel %vm96, %v125, 0.0
    %v161 = vsel %vm96, %v133, 0.0
    %v162 = vadd.f32 %v160, %v161
    %v163 = vsel %vm96, %v132, 0.0
    %v164 = vadd.f32 %v162, %v163
    %v165 = vsel %vm96, %v134, 0.0
    %v166 = vadd.f32 %v164, %v165
    %v167 = vsel %vm96, %v142, 0.0
    %v168 = vadd.f32 %v166, %v167
    %v169 = vsel %vm96, %v150, 0.0
    %v170 = vadd.f32 %v168, %v169
    %v171 = vsel %vm96, %v149, 0.0
    %v172 = vadd.f32 %v170, %v171
    %v173 = vsel %vm96, %v151, 0.0
    %v174 = vadd.f32 %v172, %v173
    %175 = vadd.xlane.f32.xlu0 %v174
    %v176 = vpop.xlane.xlu0 %175
    %v177 = vmul.f32 %v113, 0.0009765625
    %v178 = vmul.f32 %v176, 0.0009765625
    %v179 = vmul.f32 %v177, %v177
    %v180 = vsub.f32 %v178, %v179
    %v181 = vmax.f32 %v180, 0.0
    %v182 = vadd.f32 %v181, 1e-05
    %v183 = vrsqrt.pop %v182
    %v186 = vunpack.c.l.s4 269488144
    %v187 = vunpack.c.0.s8 %v186
    %v188 = vlaneseq
    %v189 = vshrl.u32 %v188, 7
    %v190 = vsub.s32 %v187, %v189
    %v191 = vrot.slane %v177, %v190
    %v193 = vsub.f32 %v50, %v191
    %v194 = vsub.f32 %v51, %v191
    %v197 = vunpack.c.l.s4 269488144
    %v198 = vunpack.c.0.s8 %v197
    %v199 = vlaneseq
    %v200 = vshrl.u32 %v199, 7
    %v201 = vsub.s32 %v198, %v200
    %v202 = vrot.slane %v183, %v201
    %v204 = vmul.f32 %v193, %v202
    %v205 = vmul.f32 %v194, %v202
    %v206 = vld [vmem:[#allocation5] sm:$0xff]
    %v208 = vlaneseq
    %v209 = vshrl.u32 %v208, 7
    %v210 = vsub.s32 0, %v209
    %v211 = vrot.slane %v206, %v210
    %v212 = vlaneseq
    %v213 = vshrl.u32 %v212, 7
    %v214 = vsub.s32 1, %v213
    %v215 = vrot.slane %v206, %v214
    %v216 = vlaneseq
    %v217 = vshrl.u32 %v216, 7
    %v218 = vsub.s32 2, %v217
    %v219 = vrot.slane %v206, %v218
    %v220 = vlaneseq
    %v221 = vshrl.u32 %v220, 7
    %v222 = vsub.s32 3, %v221
    %v223 = vrot.slane %v206, %v222
    %v224 = vlaneseq
    %v225 = vshrl.u32 %v224, 7
    %v226 = vsub.s32 4, %v225
    %v227 = vrot.slane %v206, %v226
    %v228 = vlaneseq
    %v229 = vshrl.u32 %v228, 7
    %v230 = vsub.s32 5, %v229
    %v231 = vrot.slane %v206, %v230
    %v232 = vlaneseq
    %v233 = vshrl.u32 %v232, 7
    %v234 = vsub.s32 6, %v233
    %v235 = vrot.slane %v206, %v234
    %v236 = vlaneseq
    %v237 = vshrl.u32 %v236, 7
    %v238 = vsub.s32 7, %v237
    %v239 = vrot.slane %v206, %v238
    %v240 = vcombine.low %v211, %v215
    %v241 = vcombine.low %v219, %v223
    %v243 = vunpack.c.l.s4 1983009808
    %v244 = vunpack.c.0.s8 %v243
    %v245 = vlaneseq
    %v246 = vshrl.u32 %v245, 7
    %v247 = vsub.s32 %v244, %v246
    %v248 = vrot.slane %v240, %v247
    %v250 = vunpack.c.l.s4 1983009808
    %v251 = vunpack.c.0.s8 %v250
    %v252 = vlaneseq
    %v253 = vshrl.u32 %v252, 7
    %v254 = vsub.s32 %v251, %v253
    %v255 = vrot.slane %v241, %v254
    %v256 = vcombine.low %v248, %v255
    %v257 = vcombine.low %v227, %v231
    %v258 = vcombine.low %v235, %v239
    %v260 = vunpack.c.l.s4 1983009808
    %v261 = vunpack.c.0.s8 %v260
    %v262 = vlaneseq
    %v263 = vshrl.u32 %v262, 7
    %v264 = vsub.s32 %v261, %v263
    %v265 = vrot.slane %v257, %v264
    %v267 = vunpack.c.l.s4 1983009808
    %v268 = vunpack.c.0.s8 %v267
    %v269 = vlaneseq
    %v270 = vshrl.u32 %v269, 7
    %v271 = vsub.s32 %v268, %v270
    %v272 = vrot.slane %v258, %v271
    %v273 = vcombine.low %v265, %v272
    %v276 = vmul.f32 %v204, %v256
    %v277 = vmul.f32 %v205, %v273
    %v278 = vld [vmem:[#allocation7] sm:$0xff]
    %v280 = vlaneseq
    %v281 = vshrl.u32 %v280, 7
    %v282 = vsub.s32 0, %v281
    %v283 = vrot.slane %v278, %v282
    %v284 = vlaneseq
    %v285 = vshrl.u32 %v284, 7
    %v286 = vsub.s32 1, %v285
    %v287 = vrot.slane %v278, %v286
    %v288 = vlaneseq
    %v289 = vshrl.u32 %v288, 7
    %v290 = vsub.s32 2, %v289
    %v291 = vrot.slane %v278, %v290
    %v292 = vlaneseq
    %v293 = vshrl.u32 %v292, 7
    %v294 = vsub.s32 3, %v293
    %v295 = vrot.slane %v278, %v294
    %v296 = vlaneseq
    %v297 = vshrl.u32 %v296, 7
    %v298 = vsub.s32 4, %v297
    %v299 = vrot.slane %v278, %v298
    %v300 = vlaneseq
    %v301 = vshrl.u32 %v300, 7
    %v302 = vsub.s32 5, %v301
    %v303 = vrot.slane %v278, %v302
    %v304 = vlaneseq
    %v305 = vshrl.u32 %v304, 7
    %v306 = vsub.s32 6, %v305
    %v307 = vrot.slane %v278, %v306
    %v308 = vlaneseq
    %v309 = vshrl.u32 %v308, 7
    %v310 = vsub.s32 7, %v309
    %v311 = vrot.slane %v278, %v310
    %v312 = vcombine.low %v283, %v287
    %v313 = vcombine.low %v291, %v295
    %v315 = vunpack.c.l.s4 1983009808
    %v316 = vunpack.c.0.s8 %v315
    %v317 = vlaneseq
    %v318 = vshrl.u32 %v317, 7
    %v319 = vsub.s32 %v316, %v318
    %v320 = vrot.slane %v312, %v319
    %v322 = vunpack.c.l.s4 1983009808
    %v323 = vunpack.c.0.s8 %v322
    %v324 = vlaneseq
    %v325 = vshrl.u32 %v324, 7
    %v326 = vsub.s32 %v323, %v325
    %v327 = vrot.slane %v313, %v326
    %v328 = vcombine.low %v320, %v327
    %v329 = vcombine.low %v299, %v303
    %v330 = vcombine.low %v307, %v311
    %v332 = vunpack.c.l.s4 1983009808
    %v333 = vunpack.c.0.s8 %v332
    %v334 = vlaneseq
    %v335 = vshrl.u32 %v334, 7
    %v336 = vsub.s32 %v333, %v335
    %v337 = vrot.slane %v329, %v336
    %v339 = vunpack.c.l.s4 1983009808
    %v340 = vunpack.c.0.s8 %v339
    %v341 = vlaneseq
    %v342 = vshrl.u32 %v341, 7
    %v343 = vsub.s32 %v340, %v342
    %v344 = vrot.slane %v330, %v343
    %v345 = vcombine.low %v337, %v344
    %v348 = vadd.f32 %v276, %v328
    %v349 = vadd.f32 %v277, %v345
    %350 = vst [vmem:[#allocation8] sm:$0xff] %v348
    %351 = vst [vmem:[#allocation8 + $0x8] sm:$0xff] %v349
    // Predicated region
    $region26: #{tpu_custom_call.1} parent=1 // pred_check
      _
    $region27: #{tpu_custom_call.1} parent=1 // pred_check_branch
      %353 = sbr.rel (0) target = $region29
    $region28: #{tpu_custom_call.1} parent=1 // pred_region
      %s355 = ssub.s32 256, 256
      %356 = vsyncadd [#allocation4], %s355
      %s358 = sshll.u32 [#allocation8], 4
      %s359 = int_to_ptr.vmem [resolvable:$true] %s358
      %361 = dma.vmem_to_hbm [thread:$0]  %s359, 256, %s3, [#allocation4]
    $region29: #{tpu_custom_call.1} parent=1 // pred_fallthru
      _
    // Predicated region
    $region30: #{tpu_custom_call.1} parent=1 // pred_check
      _
    $region31: #{tpu_custom_call.1} parent=1 // pred_check_branch
      %363 = sbr.rel (0) target = $region33
    $region32: #{tpu_custom_call.1} parent=1 // pred_region
      %364 = dma.done [#allocation4], 256
    $region33: #{tpu_custom_call.1} parent=1 // pred_fallthru
      _
    %365 = vsyncpa [#allocation3], 1
    %366 = vsyncpa [#allocation6], 1
    %367 = vsyncpa [#allocation4], 1

</llo_original>
